<compile_context>
chip_gen: v7x
topology: tpu7x:2x2x1
jax: 0.10.0
libtpu: 0.0.40
codegen_flags: <defaults>
</compile_context>

<pallas_src>
import jax
import jax.numpy as jnp
from jax.experimental import pallas as pl
from jax.experimental.pallas import tpu as pltpu


def _snake_kernel(a_ref, x_ref, o_ref):
    # a_ref: (ROW_TILE, 1) f32; x_ref/o_ref: (ROW_TILE, T_TILE)
    x = x_ref[...].astype(jnp.float32)
    a = a_ref[...]                      # broadcasts over lanes
    inv_a = 1.0 / (a + 1e-9)            # exact divide on row_tile/8 vregs; hides under DMA
    # NOTE(v7x): jnp.sin may lower to a VALU polynomial; if bundle dumps show VALU-bound at
    # 3.2 TB/s HBM, a cheaper bounded-range approximation is the lever. Kept exact here.
    s = jnp.sin(a * x)
    o_ref[...] = (x + inv_a * (s * s)).astype(o_ref.dtype)


def _round_up(v, m):
    return (v + m - 1) // m * m


def _pick_tile(dim, unit, cap):
    # Full-dim block when the axis is small (always a legal block shape, no ragged edge);
    # otherwise a capped tile that is a multiple of `unit` (ragged last block is masked).
    if dim <= cap:
        return dim
    return cap


def snake1d(x, alpha, *, row_tile=None, t_tile=None, target_block_bytes=4 * 1024 * 1024):
    """x: (B, C, T[, ...]) array; alpha: (1, C, 1) parameter. Returns same shape/dtype as x."""
    orig_shape = x.shape
    B, C = orig_shape[0], orig_shape[1]

    # Same flattening as the reference: reshape(B, C, -1), elementwise op, reshape back.
    x3 = x.reshape(B, C, -1)
    T = x3.shape[-1]
    rows = B * C
    xr = x3.reshape(rows, T)

    # Per-row alpha, always f32 (tiny: B*C values).
    a_c = alpha.reshape(C).astype(jnp.float32)
    a_rows = jnp.broadcast_to(a_c[None, :], (B, C)).reshape(rows, 1)

    itemsize = x.dtype.itemsize
    sub = 8 if itemsize >= 4 else (16 if itemsize == 2 else 32)  # sublane packing unit

    # Row tile: up to 256 rows (multiple of 8/16/32), or the whole row axis when small.
    if row_tile is None:
        row_tile = _pick_tile(rows, sub, 256)
    elif row_tile != rows:
        row_tile = _round_up(row_tile, sub)

    # T tile from a byte budget so bf16 and f32 blocks carry the same number of bytes.
    if t_tile is None:
        t_cap = (target_block_bytes // max(1, row_tile * itemsize)) // 128 * 128
        t_cap = max(128, min(8192, t_cap))
        t_tile = _pick_tile(T, 128, t_cap)
    elif t_tile != T:
        t_tile = _round_up(t_tile, 128)

    grid = (pl.cdiv(rows, row_tile), pl.cdiv(T, t_tile))

    # Generation-aware VMEM budget: in + out blocks, double-buffered, with headroom.
    block_bytes = row_tile * t_tile * itemsize
    try:
        vmem_cap = int(0.75 * pltpu.get_tpu_info().vmem_capacity_bytes)
    except Exception:
        vmem_cap = 48 * 1024 * 1024  # safe on every generation incl. v7x (64 MiB physical)
    vmem_limit = min(vmem_cap, max(16 * 1024 * 1024, 8 * block_bytes))

    out = pl.pallas_call(
        _snake_kernel,
        out_shape=jax.ShapeDtypeStruct((rows, T), x.dtype),
        grid_spec=pltpu.PrefetchScalarGridSpec(
            num_scalar_prefetch=0,
            grid=grid,
            in_specs=[
                # alpha: constant along the T grid axis -> stays resident in VMEM.
                pl.BlockSpec((row_tile, 1), lambda r, t: (r, 0)),
                pl.BlockSpec((row_tile, t_tile), lambda r, t: (r, t)),
            ],
            out_specs=pl.BlockSpec((row_tile, t_tile), lambda r, t: (r, t)),
        ),
        compiler_params=pltpu.CompilerParams(
            dimension_semantics=("parallel", "parallel"),
            vmem_limit_bytes=vmem_limit,
        ),
    )(a_rows, xr)

    return out.reshape(orig_shape)


if __name__ == "__main__":
    key = jax.random.PRNGKey(0)
    B, C, T = 2, 4, 16

    x = jax.random.normal(key, (B, C, T), dtype=jnp.float32)
    alpha = jnp.ones((1, C, 1), dtype=jnp.float32)  # parameter init as in the module

    y = snake1d(x, alpha)
    y = jax.block_until_ready(y)

    # Reference (same math as the torch.jit.script snake), plain JAX.
    y_ref = x + (1.0 / (alpha + 1e-9)) * jnp.sin(alpha * x) ** 2
    assert y.shape == x.shape and y.dtype == x.dtype
    assert jnp.allclose(y, y_ref, atol=1e-5, rtol=1e-5)

    # Non-trivial alpha + ragged T (exercises masked edge blocks, no wrapper pad/slice).
    k1, k2 = jax.random.split(key)
    alpha2 = 0.5 + jax.random.uniform(k1, (1, C, 1), dtype=jnp.float32)
    x2 = jax.random.normal(k2, (B, C, 200), dtype=jnp.float32)
    y2 = jax.block_until_ready(snake1d(x2, alpha2, t_tile=128))
    y2_ref = x2 + (1.0 / (alpha2 + 1e-9)) * jnp.sin(alpha2 * x2) ** 2
    assert jnp.allclose(y2, y2_ref, atol=1e-5, rtol=1e-5)

    # bf16 HBM-boundary path (compute still f32 in-kernel), loose tolerance.
    x_bf16 = x.astype(jnp.bfloat16)
    y_bf16 = jax.block_until_ready(snake1d(x_bf16, alpha))
    assert y_bf16.shape == x.shape and y_bf16.dtype == jnp.bfloat16
    ref_bf16 = (x_bf16.astype(jnp.float32)
                + (1.0 / (alpha + 1e-9)) * jnp.sin(alpha * x_bf16.astype(jnp.float32)) ** 2)
    assert jnp.allclose(y_bf16.astype(jnp.float32), ref_bf16, atol=3e-2, rtol=3e-2)

    print("KERNEL_OK")
</pallas_src>

<mosaic_0001>
module attributes {stable_mosaic.version = 11 : i64} {
  func.func @_snake_kernel(%arg0: i32, %arg1: i32, %arg2: memref<8x1xf32, #tpu.memory_space<vmem>>, %arg3: memref<8x16xf32, #tpu.memory_space<vmem>>, %arg4: memref<8x16xf32, #tpu.memory_space<vmem>>) attributes {dimension_semantics = [#tpu.dimension_semantics<parallel>, #tpu.dimension_semantics<parallel>], iteration_bounds = array<i64: 1, 1>, scalar_prefetch = 0 : i64, scratch_operands = 0 : i64, tpu.core_type = #tpu.core_type<tc>, window_params = [{transform_indices = @transform_0, window_bounds = array<i64: 8, 1>}, {transform_indices = @transform_1, window_bounds = array<i64: 8, 16>}, {transform_indices = @transform_2, window_bounds = array<i64: 8, 16>}]} {
    %c0 = arith.constant 0 : index
    %c0_0 = arith.constant 0 : index
    %0 = vector.load %arg3[%c0, %c0_0] : memref<8x16xf32, #tpu.memory_space<vmem>>, vector<8x16xf32>
    %c0_1 = arith.constant 0 : index
    %c0_2 = arith.constant 0 : index
    %1 = vector.load %arg2[%c0_1, %c0_2] : memref<8x1xf32, #tpu.memory_space<vmem>>, vector<8x1xf32>
    %cst = arith.constant 9.99999971E-10 : f32
    %2 = vector.broadcast %cst : f32 to vector<8x1xf32>
    %3 = arith.addf %1, %2 : vector<8x1xf32>
    %cst_3 = arith.constant 1.000000e+00 : f32
    %4 = vector.broadcast %cst_3 : f32 to vector<8x1xf32>
    %5 = arith.divf %4, %3 : vector<8x1xf32>
    %6 = vector.broadcast %1 : vector<8x1xf32> to vector<8x16xf32>
    %7 = arith.mulf %6, %0 : vector<8x16xf32>
    %8 = math.sin %7 : vector<8x16xf32>
    %9 = arith.mulf %8, %8 : vector<8x16xf32>
    %10 = vector.broadcast %5 : vector<8x1xf32> to vector<8x16xf32>
    %11 = arith.mulf %10, %9 : vector<8x16xf32>
    %12 = arith.addf %0, %11 : vector<8x16xf32>
    %c0_4 = arith.constant 0 : index
    %c0_5 = arith.constant 0 : index
    %13 = vector.load %arg4[%c0_4, %c0_5] : memref<8x16xf32, #tpu.memory_space<vmem>>, vector<8x16xf32>
    tpu.vector_store %arg4[%c0_4, %c0_5], %12 {strides = array<i32>} : memref<8x16xf32, #tpu.memory_space<vmem>>, vector<8x16xf32>,
    return
  }
  func.func @transform_0(%arg0: i32, %arg1: i32) -> (i32, i32) {
    %c0_i32 = arith.constant 0 : i32
    %c0_i32_0 = arith.constant 0 : i32
    return %arg0, %c0_i32 : i32, i32
  }
  func.func @transform_1(%arg0: i32, %arg1: i32) -> (i32, i32) {
    %c0_i32 = arith.constant 0 : i32
    return %arg0, %arg1 : i32, i32
  }
  func.func @transform_2(%arg0: i32, %arg1: i32) -> (i32, i32) {
    %c0_i32 = arith.constant 0 : i32
    return %arg0, %arg1 : i32, i32
  }
}

</mosaic_0001>

<llo_original>
// kernel: tpu_custom_call.1
$region0: #{tpu_custom_call.1}
  #allocation0 [shape = 'u32[]', space=smem, size = 0x4, offset = 0x4, fixed_abs, tag = 'smem constant byte address 0x4 - core index']
  #allocation1 [shape = 'u32[144,128]{1,0:T(1,128)}', space=vmem, size = 0x12000, scoped, tag = 'internal scratch']
  %s0 = inlined_call_operand.vmem [shape: f32[8,1], index: 0, kind: input, shape index: {}]
  %s1 = inlined_call_operand.vmem [shape: f32[8,16], index: 1, kind: input, shape index: {}]
  %s2 = inlined_call_operand.hbm [shape: f32[8,16], index: 2, kind: output, shape index: {}]
  %s3 = sld [smem:[#allocation0]]
  $region18: #{tpu_custom_call.1} parent=0
    _
  %s5 = ssub.s32 1, %s3
  %s6 = scalar_select 0, %s5, %s3
  $region1: #{tpu_custom_call.1} parent=0
    #allocation2 [shape = 'u8[4096]{0}', space=vmem, size = 0x1000, scoped, tag = 'output window, operand 0, single buffered']
    #allocation3 [shape = 's32[1]{0}', space=sflag, size = 0x4, scoped, tag = 'scoped memory for tpu_custom_call.1']
    %7 = vsyncpa [#allocation3], 0
    // Predicated region
    $region2: #{tpu_custom_call.1} parent=1 // pred_check
      _
    $region3: #{tpu_custom_call.1} parent=1 // pred_check_branch
      %9 = sbr.rel (0) target = $region5
    $region4: #{tpu_custom_call.1} parent=1 // pred_region
      _
    $region5: #{tpu_custom_call.1} parent=1 // pred_fallthru
      _
    // Predicated region
    $region6: #{tpu_custom_call.1} parent=1 // pred_check
      _
    $region7: #{tpu_custom_call.1} parent=1 // pred_check_branch
      %11 = sbr.rel (0) target = $region9
    $region8: #{tpu_custom_call.1} parent=1 // pred_region
      _
    $region9: #{tpu_custom_call.1} parent=1 // pred_fallthru
      _
    %v12 = vld [vmem:[%s1] sm:$0xff]
    %v13 = vld [vmem:[%s0] sm:$0xff]
    %v14 = vadd.f32 %v13, 1e-09
    %v15 = vrcp.pop %v14
    %v16 = vmul.f32 1.0, %v15
    %18 = vset.pattern.permute.xlu0 0
    %19 = vperm.xlu0 %18, %v13
    %v20 = vpop.permute.xlu0 %19
    %v22 = vmul.f32 %v20, %v12
    %v23 = vand.u32 2147483647, %v22
    %vm24 = vcmp.le.f32.partialorder %v23, 0.7853982
    %vm25 = vcmp.lt.s32.totalorder %v22, 0
    %v26 = vand.u32 %v22, 2139095040
    %v27 = vshrl.u32 %v26, 23
    %v28 = vsub.s32 %v27, 127
    %v29 = vand.u32 2147483647, %v22
    %v30 = vand.u32 %v29, 8388607
    %v31 = vor.u32 %v30, 8388608
    %v32 = vsub.s32 0, %v31
    %v33 = vadd.s32 %v28, 1
    %vm34 = vcmp.gt.s32.totalorder %v33, 0
    %v35 = vsel %vm34, %v33, 0
    %v36 = vshrl.u32 %v35, 5
    %v37 = vand.u32 %v35, 31
    %v38 = vsub.s32 32, %v37
    %v39 = vshrl.u32 683565275, %v38
    %v40 = vshll.u32 683565275, %v37
    %v41 = vshrl.u32 2475754826, %v38
    %v42 = vor.u32 %v40, %v41
    %v43 = vshll.u32 2475754826, %v37
    %v44 = vshrl.u32 2131351028, %v38
    %v45 = vor.u32 %v43, %v44
    %v46 = vshll.u32 2131351028, %v37
    %v47 = vshrl.u32 2102212464, %v38
    %v48 = vor.u32 %v46, %v47
    %v49 = vshll.u32 2102212464, %v37
    %v50 = vshrl.u32 920167782, %v38
    %v51 = vor.u32 %v49, %v50
    %v52 = vshll.u32 920167782, %v37
    %v53 = vshrl.u32 1326507024, %v38
    %v54 = vor.u32 %v52, %v53
    %vm55 = vcmp.lt.s32.totalorder %v36, 1
    %vm56 = vcmp.lt.s32.totalorder %v36, 2
    %vm57 = vcmp.lt.s32.totalorder %v36, 3
    %vm58 = vcmp.lt.s32.totalorder %v36, 4
    %v59 = vsel %vm55, %v39, %v42
    %v60 = vsel %vm58, %v48, 2102212464
    %v61 = vsel %vm57, %v45, %v60
    %v62 = vsel %vm56, %v59, %v61
    %v63 = vsel %vm55, %v42, %v45
    %v64 = vsel %vm58, %v51, 920167782
    %v65 = vsel %vm57, %v48, %v64
    %v66 = vsel %vm56, %v63, %v65
    %v67 = vsel %vm55, %v45, %v48
    %v68 = vsel %vm58, %v54, 1326507024
    %v69 = vsel %vm57, %v51, %v68
    %v70 = vsel %vm56, %v67, %v69
    %v71 = vshll.u32 %v31, 8
    %v72 = vmul.u32.u64.compose %v71, %v70
    %v73 = vextract.low.u32 %v72
    %v74 = vextract.high.u32 %v72
    %v75 = vmul.u32.u64.compose %v71, %v66
    %v76 = vextract.low.u32 %v75
    %v77 = vextract.high.u32 %v75
    %v78 = vmul.u32 %v71, %v62
    %v79 = vadd.s32 %v74, %v76
    %vm80 = vc.u32 %v74, %v76
    %v81 = vadd.s32 %v77, 1
    %v82 = vsel %vm80, %v81, %v77
    %v83 = vadd.s32 %v78, %v82
    %v84 = vadd.s32 %v83, 536870912
    %v85 = vshrl.u32 %v84, 30
    %v86 = vshll.u32 %v85, 30
    %v87 = vsub.s32 %v83, %v86
    %vm88 = vcmp.lt.s32.totalorder %v87, 0
    %v89 = vsub.s32 0, %v87
    %v90 = vsel %vm88, %v89, %v87
    %v91 = vclz %v90
    %v92 = vsub.s32 %v91, 2
    %vm93 = vcmp.gt.s32.totalorder 0, %v92
    %v94 = vsel %vm93, 0, %v92
    %v95 = vsub.s32 32, %v94
    %v96 = vshll.u32 %v87, %v94
    %v97 = vshrl.u32 %v79, %v95
    %v98 = vor.u32 %v96, %v97
    %v99 = vsub.s32 4294967266, %v94
    %v100 = vadd.s32 %v99, 127
    %v101 = vshll.u32 %v100, 23
    %v102 = vor.u32 4788187, %v101
    %v103 = vand.u32 2147483647, %v102
    %v105 = vcvt.s32.f32 %v98
    %v106 = vmul.f32 %v105, %v103
    %v107 = vxor.u32 %v106, 2147483648
    %v108 = vsel %vm25, %v107, %v106
    %v109 = vsub.s32 4, %v85
    %v110 = vsel %vm25, %v109, %v85
    %v111 = vsel %vm24, %v22, %v108
    %v112 = vsel %vm24, 0, %v110
    %v113 = vcosq.f32.pop %v111
    %v114 = vsinq.f32.pop %v111
    %vm115 = vweird.f32 %v22
    %v116 = vadd.s32 %v112, 3
    %v117 = vand.u32 %v116, 3
    %vm118 = vcmp.lt.s32.totalorder %v117, 2
    %vm119 = vcmp.eq.s32.totalorder %v117, 0
    %v120 = vxor.u32 %v114, 2147483648
    %v121 = vsel %vm119, %v113, %v120
    %vm122 = vcmp.eq.s32.totalorder %v117, 2
    %v123 = vxor.u32 %v113, 2147483648
    %v124 = vsel %vm122, %v123, %v114
    %v125 = vsel %vm118, %v121, %v124
    %v126 = vsel %vm115, nan, %v125
    %v127 = vmul.f32 %v126, %v126
    %129 = vset.pattern.permute.xlu0 0
    %130 = vperm.xlu0 %129, %v16
    %v131 = vpop.permute.xlu0 %130
    %v133 = vmul.f32 %v131, %v127
    %v134 = vadd.f32 %v12, %v133
    %vm135 = vcmask 130048
    %136 = vst.msk [vmem:[#allocation2] sm:$0xff] %vm135, %v134
    // Predicated region
    $region10: #{tpu_custom_call.1} parent=1 // pred_check
      _
    $region11: #{tpu_custom_call.1} parent=1 // pred_check_branch
      %138 = sbr.rel (0) target = $region13
    $region12: #{tpu_custom_call.1} parent=1 // pred_region
      %s140 = ssub.s32 128, 128
      %141 = vsyncadd [#allocation3], %s140
      %s143 = sshll.u32 [#allocation2], 4
      %s144 = int_to_ptr.vmem [resolvable:$true] %s143
      %146 = dma.vmem_to_hbm [thread:$0]  %s144, 128, %s2, [#allocation3]
    $region13: #{tpu_custom_call.1} parent=1 // pred_fallthru
      _
    // Predicated region
    $region14: #{tpu_custom_call.1} parent=1 // pred_check
      _
    $region15: #{tpu_custom_call.1} parent=1 // pred_check_branch
      %148 = sbr.rel (0) target = $region17
    $region16: #{tpu_custom_call.1} parent=1 // pred_region
      %149 = dma.done [#allocation3], 128
    $region17: #{tpu_custom_call.1} parent=1 // pred_fallthru
      _
    %150 = vsyncpa [#allocation3], 1

</llo_original>
